<compile_context>
chip_gen: v5e
topology: v5e:2x2
jax: 0.10.0
libtpu: 0.0.40
codegen_flags: <defaults>
</compile_context>

<pallas_src>
import math

import jax
import jax.numpy as jnp
from jax.experimental import pallas as pl
from jax.experimental.pallas import tpu as pltpu


# ----------------------------------------------------------------------------
# Reference buffer (mirrors PositionalEncoding.__init__). Used only for the
# pure-JAX correctness reference in __main__ — the kernel generates pe on the fly.
# ----------------------------------------------------------------------------
def make_positional_encoding_table(max_len: int, d_model: int) -> jnp.ndarray:
    position = jnp.arange(max_len, dtype=jnp.float32)[:, None]                  # (L, 1)
    div_term = jnp.exp(
        jnp.arange(0, d_model, 2, dtype=jnp.float32) * (-math.log(10000.0) / d_model)
    )                                                                            # (D/2,)
    pe = jnp.zeros((max_len, d_model), dtype=jnp.float32)
    pe = pe.at[:, 0::2].set(jnp.sin(position * div_term))
    pe = pe.at[:, 1::2].set(jnp.cos(position * div_term))
    return pe[:, None, :]                                                        # (L, 1, D)


# ----------------------------------------------------------------------------
# In-kernel positional-encoding tile (computed on the fly; zero HBM traffic).
# All lane-only terms are (1, BD); the row term is (tS, 1); the only full-tile
# ops are one broadcast multiply, one add and one sin (EUP).
# ----------------------------------------------------------------------------
def _pe_block(tile_shape, row_offset, d_model: int):
    tS, BD = tile_shape
    lane = jax.lax.broadcasted_iota(jnp.int32, (1, BD), 1)        # lane = b*D + d
    d = lane % d_model
    parity = d % 2
    d_even = (d - parity).astype(jnp.float32)
    freq = jnp.exp(d_even * (-math.log(10000.0) / d_model))       # (1, BD): BD exps/tile
    phase = parity.astype(jnp.float32) * (math.pi / 2.0)          # sin(a + pi/2) == cos(a)
    pos = (row_offset
           + jax.lax.broadcasted_iota(jnp.int32, (tS, 1), 0)).astype(jnp.float32)
    return jnp.sin(pos * freq + phase)                            # (tS, BD): 1 sin/elem


# ----------------------------------------------------------------------------
# Pallas kernels
# ----------------------------------------------------------------------------
def _make_add_pe_kernel(d_model: int, tile_rows: int):
    def kernel(x_ref, o_ref):
        row0 = pl.program_id(0) * tile_rows
        pe = _pe_block(x_ref.shape, row0, d_model)
        o_ref[...] = (x_ref[...] + pe).astype(o_ref.dtype)

    return kernel


def _make_add_pe_dropout_kernel(d_model: int, tile_rows: int, dropout_p: float):
    inv_keep = 1.0 / (1.0 - dropout_p)   # Python float -> jaxpr literal

    def kernel(x_ref, u_ref, o_ref):
        row0 = pl.program_id(0) * tile_rows
        y = x_ref[...] + _pe_block(x_ref.shape, row0, d_model)
        keep = u_ref[...] >= dropout_p                   # keep with prob 1-p
        o_ref[...] = jnp.where(keep, y * inv_keep, 0.0).astype(o_ref.dtype)

    return kernel


# ----------------------------------------------------------------------------
# Wrapper
# ----------------------------------------------------------------------------
def _pick_tile_rows(num_rows: int, row_bytes: int, *,
                    target_bytes: int = 2 << 20, min_tiles: int = 4) -> int:
    """Row tile: multiple of 8, <= ~2 MiB/buffer, and (if possible) >=min_tiles
    grid steps so v7x's two TensorCores both get work."""
    if num_rows <= 8:
        return num_rows
    cap = max(8, (target_bytes // max(row_bytes, 1)) // 8 * 8)
    split = max(8, ((pl.cdiv(num_rows, min_tiles) + 7) // 8) * 8)
    return min(cap, split, num_rows)


def positional_encoding_forward(
    x: jnp.ndarray,
    *,
    dropout_p: float = 0.1,
    training: bool = False,
    rng_key=None,
) -> jnp.ndarray:
    """Equivalent of PositionalEncoding.forward(x); x is (S, B, D).

    training=False corresponds to module.eval() (dropout is identity)."""
    S, B, D = x.shape
    assert D % 2 == 0, "PositionalEncoding requires an even d_model (as in PyTorch)."
    BD = B * D
    # Lane-dense fold: lane = b*D + d. (BD == 128 for the demo shape.)
    # TODO(synk): if B*D is not a multiple of 128, pad D to keep stores unmasked.
    x2 = x.reshape(S, BD)

    tS = _pick_tile_rows(S, BD * x.dtype.itemsize)
    grid = (pl.cdiv(S, tS),)

    x_spec = pl.BlockSpec((tS, BD), lambda i: (i, 0))
    o_spec = pl.BlockSpec((tS, BD), lambda i: (i, 0))
    out_shape = jax.ShapeDtypeStruct((S, BD), x.dtype)
    nbytes = S * BD * x.dtype.itemsize
    cparams = pltpu.CompilerParams(dimension_semantics=("parallel",))

    if (not training) or dropout_p == 0.0:
        cost = pl.CostEstimate(
            flops=2 * S * BD,                       # broadcast mul+add for pe, add to x
            transcendentals=S * BD + grid[0] * BD,  # one sin/elem + per-tile exp row
            bytes_accessed=2 * nbytes,              # read x, write out (no pe stream)
        )
        out2 = pl.pallas_call(
            _make_add_pe_kernel(D, tS),
            out_shape=out_shape,
            grid=grid,
            in_specs=[x_spec],
            out_specs=o_spec,
            compiler_params=cparams,
            cost_estimate=cost,
            input_output_aliases={0: 0},
        )(x2)
    else:
        if dropout_p >= 1.0:
            return jnp.zeros_like(x)
        if rng_key is None:
            rng_key = jax.random.PRNGKey(0)
        # Host-side uniform stream (portable; see header note re: on-chip PRNG).
        u = jax.random.uniform(rng_key, (S, BD), dtype=jnp.float32)
        cost = pl.CostEstimate(
            flops=4 * S * BD,
            transcendentals=S * BD + grid[0] * BD,
            bytes_accessed=3 * nbytes,              # read x, read u, write out
        )
        out2 = pl.pallas_call(
            _make_add_pe_dropout_kernel(D, tS, float(dropout_p)),
            out_shape=out_shape,
            grid=grid,
            in_specs=[x_spec, x_spec],
            out_specs=o_spec,
            compiler_params=cparams,
            cost_estimate=cost,
            input_output_aliases={0: 0},
        )(x2, u)

    return out2.reshape(S, B, D)


# ----------------------------------------------------------------------------
# Main
# ----------------------------------------------------------------------------
if __name__ == "__main__":
    d_model = 64
    max_len = 5000
    seq_len = 8
    batch = 2

    key = jax.random.PRNGKey(0)
    k_x, k_drop = jax.random.split(key)
    x = jax.random.normal(k_x, (seq_len, batch, d_model), dtype=jnp.float32)

    # Pure-JAX reference built from the same buffer as the PyTorch module.
    pe = make_positional_encoding_table(max_len, d_model)
    ref = jax.block_until_ready(x + pe[:seq_len])

    # Eval-mode forward (dropout == identity), matching module.eval().
    out = positional_encoding_forward(x, dropout_p=0.1, training=False)
    out = jax.block_until_ready(out)
    assert out.shape == (seq_len, batch, d_model)
    assert out.dtype == x.dtype
    assert jnp.allclose(out, ref, atol=1e-5, rtol=1e-5), float(jnp.max(jnp.abs(out - ref)))

    # Training-mode (dropout) path: every element is 0 or ref/(1-p).
    p = 0.1
    out_train = positional_encoding_forward(
        x, dropout_p=p, training=True, rng_key=k_drop)
    out_train = jax.block_until_ready(out_train)
    assert out_train.shape == (seq_len, batch, d_model)
    dropped = jnp.isclose(out_train, 0.0, atol=1e-6)
    scaled = jnp.isclose(out_train, ref / (1.0 - p), atol=1e-4, rtol=1e-4)
    assert bool(jnp.all(dropped | scaled))

    print("KERNEL_OK")
</pallas_src>

<mosaic_0001>
module attributes {stable_mosaic.version = 11 : i64} {
  func.func @kernel(%arg0: i32, %arg1: memref<8x128xf32, #tpu.memory_space<vmem>>, %arg2: memref<8x128xf32, #tpu.memory_space<vmem>>) attributes {dimension_semantics = [#tpu.dimension_semantics<parallel>], iteration_bounds = array<i64: 1>, scalar_prefetch = 0 : i64, scratch_operands = 0 : i64, tpu.core_type = #tpu.core_type<tc>, window_params = [{transform_indices = @transform_0, window_bounds = array<i64: 8, 128>}, {transform_indices = @transform_1, window_bounds = array<i64: 8, 128>}]} {
    %c8_i32 = arith.constant 8 : i32
    %0 = arith.muli %arg0, %c8_i32 : i32
    %1 = tpu.iota {dimensions = array<i32: 1>} : vector<1x128xi32>
    %c64_i32 = arith.constant 64 : i32
    %c0_i32 = arith.constant 0 : i32
    %2 = arith.cmpi eq, %c64_i32, %c0_i32 : i32
    %c1_i32 = arith.constant 1 : i32
    %3 = arith.select %2, %c1_i32, %c64_i32 : i32
    %4 = vector.broadcast %3 : i32 to vector<1x128xi32>
    %5 = arith.remsi %1, %4 : vector<1x128xi32>
    %c0_i32_0 = arith.constant 0 : i32
    %6 = vector.broadcast %c0_i32_0 : i32 to vector<1x128xi32>
    %7 = arith.cmpi ne, %5, %6 : vector<1x128xi32>
    %c0_i32_1 = arith.constant 0 : i32
    %8 = vector.broadcast %c0_i32_1 : i32 to vector<1x128xi32>
    %9 = arith.cmpi slt, %5, %8 : vector<1x128xi32>
    %c0_i32_2 = arith.constant 0 : i32
    %10 = arith.cmpi slt, %3, %c0_i32_2 : i32
    %11 = vector.broadcast %10 : i1 to vector<1x128xi1>
    %12 = vector.broadcast %11 : vector<1x128xi1> to vector<1x128xi1>
    %13 = arith.xori %9, %12 : vector<1x128xi1>
    %14 = arith.andi %13, %7 : vector<1x128xi1>
    %15 = vector.broadcast %3 : i32 to vector<1x128xi32>
    %16 = arith.addi %5, %15 : vector<1x128xi32>
    %17 = arith.select %14, %16, %5 : vector<1x128xi1>, vector<1x128xi32>
    %c2_i32 = arith.constant 2 : i32
    %c0_i32_3 = arith.constant 0 : i32
    %18 = arith.cmpi eq, %c2_i32, %c0_i32_3 : i32
    %c1_i32_4 = arith.constant 1 : i32
    %19 = arith.select %18, %c1_i32_4, %c2_i32 : i32
    %20 = vector.broadcast %19 : i32 to vector<1x128xi32>
    %21 = arith.remsi %17, %20 : vector<1x128xi32>
    %c0_i32_5 = arith.constant 0 : i32
    %22 = vector.broadcast %c0_i32_5 : i32 to vector<1x128xi32>
    %23 = arith.cmpi ne, %21, %22 : vector<1x128xi32>
    %c0_i32_6 = arith.constant 0 : i32
    %24 = vector.broadcast %c0_i32_6 : i32 to vector<1x128xi32>
    %25 = arith.cmpi slt, %21, %24 : vector<1x128xi32>
    %c0_i32_7 = arith.constant 0 : i32
    %26 = arith.cmpi slt, %19, %c0_i32_7 : i32
    %27 = vector.broadcast %26 : i1 to vector<1x128xi1>
    %28 = vector.broadcast %27 : vector<1x128xi1> to vector<1x128xi1>
    %29 = arith.xori %25, %28 : vector<1x128xi1>
    %30 = arith.andi %29, %23 : vector<1x128xi1>
    %31 = vector.broadcast %19 : i32 to vector<1x128xi32>
    %32 = arith.addi %21, %31 : vector<1x128xi32>
    %33 = arith.select %30, %32, %21 : vector<1x128xi1>, vector<1x128xi32>
    %34 = arith.subi %17, %33 : vector<1x128xi32>
    %35 = arith.sitofp %34 : vector<1x128xi32> to vector<1x128xf32>
    %cst = arith.constant -0.14391157 : f32
    %36 = vector.broadcast %cst : f32 to vector<1x128xf32>
    %37 = arith.mulf %35, %36 : vector<1x128xf32>
    %38 = math.exp %37 : vector<1x128xf32>
    %39 = arith.sitofp %33 : vector<1x128xi32> to vector<1x128xf32>
    %cst_8 = arith.constant 1.57079637 : f32
    %40 = vector.broadcast %cst_8 : f32 to vector<1x128xf32>
    %41 = arith.mulf %39, %40 : vector<1x128xf32>
    %42 = tpu.iota {dimensions = array<i32: 0>} : vector<8x1xi32>
    %43 = vector.broadcast %0 : i32 to vector<8x1xi32>
    %44 = arith.addi %43, %42 : vector<8x1xi32>
    %45 = arith.sitofp %44 : vector<8x1xi32> to vector<8x1xf32>
    %46 = vector.broadcast %45 : vector<8x1xf32> to vector<8x128xf32>
    %47 = vector.broadcast %38 : vector<1x128xf32> to vector<8x128xf32>
    %48 = arith.mulf %46, %47 : vector<8x128xf32>
    %49 = vector.broadcast %41 : vector<1x128xf32> to vector<8x128xf32>
    %50 = arith.addf %48, %49 : vector<8x128xf32>
    %51 = math.sin %50 : vector<8x128xf32>
    %c0 = arith.constant 0 : index
    %c0_9 = arith.constant 0 : index
    %52 = vector.load %arg1[%c0, %c0_9] : memref<8x128xf32, #tpu.memory_space<vmem>>, vector<8x128xf32>
    %53 = arith.addf %52, %51 : vector<8x128xf32>
    %c0_10 = arith.constant 0 : index
    %c0_11 = arith.constant 0 : index
    %54 = vector.load %arg2[%c0_10, %c0_11] : memref<8x128xf32, #tpu.memory_space<vmem>>, vector<8x128xf32>
    tpu.vector_store %arg2[%c0_10, %c0_11], %53 {strides = array<i32>} : memref<8x128xf32, #tpu.memory_space<vmem>>, vector<8x128xf32>,
    return
  }
  func.func @transform_0(%arg0: i32) -> (i32, i32) {
    %c0_i32 = arith.constant 0 : i32
    %c0_i32_0 = arith.constant 0 : i32
    return %arg0, %c0_i32 : i32, i32
  }
  func.func @transform_1(%arg0: i32) -> (i32, i32) {
    %c0_i32 = arith.constant 0 : i32
    %c0_i32_0 = arith.constant 0 : i32
    return %arg0, %c0_i32 : i32, i32
  }
}

</mosaic_0001>

<llo_original>
// kernel: tpu_custom_call.1
$region0: #{tpu_custom_call.1}
  #allocation0 [shape = 'u32[]', space=smem, size = 0x4, offset = 0x4, fixed_abs, tag = 'smem constant byte address 0x4 - core index']
  #allocation1 [shape = 'u32[72,128]{1,0:T(1,128)}', space=vmem, size = 0x9000, scoped, tag = 'internal scratch']
  %s0 = inlined_call_operand.hbm [shape: f32[8,128], index: 0, kind: input, shape index: {}, may-alias: {0,1}]
  %s1 = inlined_call_operand.hbm [shape: f32[8,128], index: 1, kind: output, shape index: {}, may-alias: {0,1}]
  %s2 = sld [smem:[#allocation0]]
  $region18: #{tpu_custom_call.1} parent=0
    _
  %s4 = ssub.s32 1, %s2
  %s5 = scalar_select 0, %s4, %s2
  $region1: #{tpu_custom_call.1} parent=0
    #allocation2 [shape = 'u8[4096]{0}', space=vmem, size = 0x1000, scoped, tag = 'input window, operand 0, single buffered']
    #allocation3 [shape = 's32[1]{0}', space=sflag, size = 0x4, scoped, tag = 'scoped memory for tpu_custom_call.1']
    #allocation4 [shape = 's32[1]{0}', space=sflag, size = 0x4, scoped, tag = 'scoped memory for tpu_custom_call.1']
    #allocation5 [shape = 'u8[4096]{0}', space=vmem, size = 0x1000, scoped, tag = 'output window, operand 0, single buffered']
    %6 = vsyncpa [#allocation3], 0
    %7 = vsyncpa [#allocation4], 0
    // Predicated region
    $region2: #{tpu_custom_call.1} parent=1 // pred_check
      _
    $region3: #{tpu_custom_call.1} parent=1 // pred_check_branch
      %9 = sbr.rel (0) target = $region5
    $region4: #{tpu_custom_call.1} parent=1 // pred_region
      %11 = vsyncadd [#allocation3], 0
      %s13 = sshll.u32 %s0, 4
      %s14 = int_to_ptr.hbm [resolvable:$true] %s13
      %s15 = sshll.u32 [#allocation2], 4
      %s16 = int_to_ptr.vmem [resolvable:$true] %s15
      %18 = dma.hbm_to_vmem [thread:$0]  %s14, 128, %s16, [#allocation3]
    $region5: #{tpu_custom_call.1} parent=1 // pred_fallthru
      _
    // Predicated region
    $region6: #{tpu_custom_call.1} parent=1 // pred_check
      _
    $region7: #{tpu_custom_call.1} parent=1 // pred_check_branch
      %20 = sbr.rel (0) target = $region9
    $region8: #{tpu_custom_call.1} parent=1 // pred_region
      %22 = dma.done [#allocation3], 128
    $region9: #{tpu_custom_call.1} parent=1 // pred_fallthru
      _
    %s23 = smul.u32 0, 8
    %v24 = vlaneseq
    %v25 = vand.u32 %v24, 127
    %vm26 = vcmp.lt.s32.totalorder %v25, 0
    %v27 = vsub.s32 0, %v25
    %v28 = vsel %vm26, %v27, %v25
    %v29 = vshrl.u32 %v28, 6
    %v30 = vand.u32 %v28, 63
    %v31 = vsub.s32 0, %v30
    %v32 = vsel %vm26, %v31, %v30
    %vm33 = vcmp.ne.s32.totalorder %v32, 0
    %vm34 = vcmp.lt.s32.totalorder %v32, 0
    %vm35 = vmand %vm34, %vm33
    %v36 = vadd.s32 %v32, 64
    %v37 = vsel %vm35, %v36, %v32
    %vm38 = vcmp.lt.s32.totalorder %v37, 0
    %v39 = vsub.s32 0, %v37
    %v40 = vsel %vm38, %v39, %v37
    %v41 = vshrl.u32 %v40, 1
    %v42 = vand.u32 %v40, 1
    %v43 = vsub.s32 0, %v42
    %v44 = vsel %vm38, %v43, %v42
    %vm45 = vcmp.ne.s32.totalorder %v44, 0
    %vm46 = vcmp.lt.s32.totalorder %v44, 0
    %vm47 = vmand %vm46, %vm45
    %v48 = vadd.s32 %v44, 2
    %v49 = vsel %vm47, %v48, %v44
    %v50 = vsub.s32 %v37, %v49
    %v51 = vcvt.s32.f32 %v50
    %v52 = vmul.f32 %v51, -0.14391157
    %v53 = vmul.f32 %v52, 1.442695
    %v54 = vpow.pop %v53
    %v55 = vcvt.s32.f32 %v49
    %v56 = vmul.f32 %v55, 1.5707964
    %v57 = vlaneseq
    %v58 = vshrl.u32 %v57, 7
    %v59 = vstv %s23
    %v60 = vadd.s32 %v59, %v58
    %v61 = vcvt.s32.f32 %v60
    %v62 = vmul.f32 %v61, %v54
    %v63 = vadd.f32 %v62, %v56
    %v64 = vand.u32 2147483647, %v63
    %vm65 = vcmp.le.f32.partialorder %v64, 0.7853982
    %vm66 = vcmp.lt.s32.totalorder %v63, 0
    %v67 = vand.u32 %v63, 2139095040
    %v68 = vshrl.u32 %v67, 23
    %v69 = vsub.s32 %v68, 127
    %v70 = vand.u32 2147483647, %v63
    %v71 = vand.u32 %v70, 8388607
    %v72 = vor.u32 %v71, 8388608
    %v73 = vsub.s32 0, %v72
    %v74 = vadd.s32 %v69, 1
    %vm75 = vcmp.gt.s32.totalorder %v74, 0
    %v76 = vsel %vm75, %v74, 0
    %v77 = vshrl.u32 %v76, 5
    %v78 = vand.u32 %v76, 31
    %v79 = vsub.s32 32, %v78
    %v80 = vshrl.u32 683565275, %v79
    %v81 = vshll.u32 683565275, %v78
    %v82 = vshrl.u32 2475754826, %v79
    %v83 = vor.u32 %v81, %v82
    %v84 = vshll.u32 2475754826, %v78
    %v85 = vshrl.u32 2131351028, %v79
    %v86 = vor.u32 %v84, %v85
    %v87 = vshll.u32 2131351028, %v78
    %v88 = vshrl.u32 2102212464, %v79
    %v89 = vor.u32 %v87, %v88
    %v90 = vshll.u32 2102212464, %v78
    %v91 = vshrl.u32 920167782, %v79
    %v92 = vor.u32 %v90, %v91
    %v93 = vshll.u32 920167782, %v78
    %v94 = vshrl.u32 1326507024, %v79
    %v95 = vor.u32 %v93, %v94
    %vm96 = vcmp.lt.s32.totalorder %v77, 1
    %vm97 = vcmp.lt.s32.totalorder %v77, 2
    %vm98 = vcmp.lt.s32.totalorder %v77, 3
    %vm99 = vcmp.lt.s32.totalorder %v77, 4
    %v100 = vsel %vm96, %v80, %v83
    %v101 = vsel %vm99, %v89, 2102212464
    %v102 = vsel %vm98, %v86, %v101
    %v103 = vsel %vm97, %v100, %v102
    %v104 = vsel %vm96, %v83, %v86
    %v105 = vsel %vm99, %v92, 920167782
    %v106 = vsel %vm98, %v89, %v105
    %v107 = vsel %vm97, %v104, %v106
    %v108 = vsel %vm96, %v86, %v89
    %v109 = vsel %vm99, %v95, 1326507024
    %v110 = vsel %vm98, %v92, %v109
    %v111 = vsel %vm97, %v108, %v110
    %v112 = vshll.u32 %v72, 8
    %v113 = vand.u32 %v112, 65535
    %v114 = vshrl.u32 %v112, 16
    %v115 = vand.u32 %v111, 65535
    %v116 = vshrl.u32 %v111, 16
    %v117 = vmul.u32 %v113, %v115
    %v118 = vmul.u32 %v113, %v116
    %v119 = vmul.u32 %v114, %v115
    %v120 = vmul.u32 %v114, %v116
    %v121 = vshll.u32 %v118, 16
    %v122 = vshrl.u32 %v118, 16
    %v123 = vshll.u32 %v119, 16
    %v124 = vshrl.u32 %v119, 16
    %vm125 = vc.u32 %v117, %v121
    %v126 = vsel %vm125, 1, 0
    %v127 = vadd.s32 %v117, %v121
    %v128 = vadd.s32 %v120, %v126
    %vm129 = vc.u32 %v127, %v123
    %v130 = vsel %vm129, 1, 0
    %v131 = vadd.s32 %v127, %v123
    %v132 = vadd.s32 %v128, %v130
    %v133 = vadd.s32 %v132, %v122
    %v134 = vadd.s32 %v133, %v124
    %v135 = vand.u32 %v112, 65535
    %v136 = vshrl.u32 %v112, 16
    %v137 = vand.u32 %v107, 65535
    %v138 = vshrl.u32 %v107, 16
    %v139 = vmul.u32 %v135, %v137
    %v140 = vmul.u32 %v135, %v138
    %v141 = vmul.u32 %v136, %v137
    %v142 = vmul.u32 %v136, %v138
    %v143 = vshll.u32 %v140, 16
    %v144 = vshrl.u32 %v140, 16
    %v145 = vshll.u32 %v141, 16
    %v146 = vshrl.u32 %v141, 16
    %vm147 = vc.u32 %v139, %v143
    %v148 = vsel %vm147, 1, 0
    %v149 = vadd.s32 %v139, %v143
    %v150 = vadd.s32 %v142, %v148
    %vm151 = vc.u32 %v149, %v145
    %v152 = vsel %vm151, 1, 0
    %v153 = vadd.s32 %v149, %v145
    %v154 = vadd.s32 %v150, %v152
    %v155 = vadd.s32 %v154, %v144
    %v156 = vadd.s32 %v155, %v146
    %v157 = vmul.u32 %v112, %v103
    %v158 = vadd.s32 %v134, %v153
    %vm159 = vc.u32 %v134, %v153
    %v160 = vadd.s32 %v156, 1
    %v161 = vsel %vm159, %v160, %v156
    %v162 = vadd.s32 %v157, %v161
    %v163 = vadd.s32 %v162, 536870912
    %v164 = vshrl.u32 %v163, 30
    %v165 = vshll.u32 %v164, 30
    %v166 = vsub.s32 %v162, %v165
    %vm167 = vcmp.lt.s32.totalorder %v166, 0
    %v168 = vsub.s32 0, %v166
    %v169 = vsel %vm167, %v168, %v166
    %v170 = vclz %v169
    %v171 = vsub.s32 %v170, 2
    %vm172 = vcmp.gt.s32.totalorder 0, %v171
    %v173 = vsel %vm172, 0, %v171
    %v174 = vsub.s32 32, %v173
    %v175 = vshll.u32 %v166, %v173
    %v176 = vshrl.u32 %v158, %v174
    %v177 = vor.u32 %v175, %v176
    %v178 = vsub.s32 4294967266, %v173
    %v179 = vadd.s32 %v178, 127
    %v180 = vshll.u32 %v179, 23
    %v181 = vor.u32 4788187, %v180
    %v182 = vand.u32 2147483647, %v181
    %v184 = vcvt.s32.f32 %v177
    %v185 = vmul.f32 %v184, %v182
    %v186 = vxor.u32 %v185, 2147483648
    %v187 = vsel %vm66, %v186, %v185
    %v188 = vsub.s32 4, %v164
    %v189 = vsel %vm66, %v188, %v164
    %v190 = vsel %vm65, %v63, %v187
    %v191 = vsel %vm65, 0, %v189
    %v192 = vmul.f32 %v190, %v190
    %v193 = vmul.f32 %v192, -0.001358992
    %v194 = vadd.f32 %v193, 0.041655596
    %v195 = vmul.f32 %v192, %v194
    %v196 = vadd.f32 %v195, -0.4999988
    %v197 = vmul.f32 %v192, %v196
    %v198 = vadd.f32 1.0, %v197
    %v199 = vmul.f32 %v190, %v190
    %v200 = vmul.f32 %v199, -0.00019511016
    %v201 = vadd.f32 %v200, 0.008332121
    %v202 = vmul.f32 %v199, %v201
    %v203 = vadd.f32 %v202, -0.16666654
    %v204 = vmul.f32 %v199, %v203
    %v205 = vadd.f32 %v204, 1.0
    %v206 = vmul.f32 %v205, %v190
    %vm207 = vweird.f32 %v63
    %v208 = vadd.s32 %v191, 3
    %v209 = vand.u32 %v208, 3
    %vm210 = vcmp.lt.s32.totalorder %v209, 2
    %vm211 = vcmp.eq.s32.totalorder %v209, 0
    %v212 = vxor.u32 %v206, 2147483648
    %v213 = vsel %vm211, %v198, %v212
    %vm214 = vcmp.eq.s32.totalorder %v209, 2
    %v215 = vxor.u32 %v198, 2147483648
    %v216 = vsel %vm214, %v215, %v206
    %v217 = vsel %vm210, %v213, %v216
    %v218 = vsel %vm207, nan, %v217
    %v219 = vld [vmem:[#allocation2] sm:$0xff]
    %v220 = vadd.f32 %v219, %v218
    %221 = vst [vmem:[#allocation5] sm:$0xff] %v220
    // Predicated region
    $region10: #{tpu_custom_call.1} parent=1 // pred_check
      _
    $region11: #{tpu_custom_call.1} parent=1 // pred_check_branch
      %223 = sbr.rel (0) target = $region13
    $region12: #{tpu_custom_call.1} parent=1 // pred_region
      %225 = vsyncadd [#allocation4], 0
      %s227 = sshll.u32 [#allocation5], 4
      %s228 = int_to_ptr.vmem [resolvable:$true] %s227
      %s229 = sshll.u32 %s1, 4
      %s230 = int_to_ptr.hbm [resolvable:$true] %s229
      %232 = dma.vmem_to_hbm [thread:$0]  %s228, 128, %s230, [#allocation4]
    $region13: #{tpu_custom_call.1} parent=1 // pred_fallthru
      _
    // Predicated region
    $region14: #{tpu_custom_call.1} parent=1 // pred_check
      _
    $region15: #{tpu_custom_call.1} parent=1 // pred_check_branch
      %234 = sbr.rel (0) target = $region17
    $region16: #{tpu_custom_call.1} parent=1 // pred_region
      %236 = dma.done [#allocation4], 128
    $region17: #{tpu_custom_call.1} parent=1 // pred_fallthru
      _
    %237 = vsyncpa [#allocation3], 1
    %238 = vsyncpa [#allocation4], 1

</llo_original>
